<compile_context>
chip_gen: v7x
topology: tpu7x:2x2x1
jax: 0.10.0
libtpu: 0.0.40
codegen_flags: <defaults>
</compile_context>

<pallas_src>
import functools

import jax
import jax.numpy as jnp
from jax.experimental import pallas as pl
from jax.experimental.pallas import tpu as pltpu


def _round_up(x, m):
    return (x + m - 1) // m * m


# ---------------------------------------------------------------------------
# Small-table fast path: whole table VMEM-resident, lookup = one-hot @ table.
# ---------------------------------------------------------------------------
def _onehot_kernel(idx_ref, table_ref, out_ref):
    # idx_ref:   (TB, 1) int32  token ids for this block
    # table_ref: (V, Dp)        embedding table (VMEM-resident, revisited)
    # out_ref:   (TB, Dp)       output block
    tb = idx_ref.shape[0]
    v = table_ref.shape[0]
    iota = jax.lax.broadcasted_iota(jnp.int32, (tb, v), 1)
    one_hot = (idx_ref[...] == iota).astype(table_ref.dtype)
    out_ref[...] = jnp.dot(
        one_hot, table_ref[...], preferred_element_type=jnp.float32
    ).astype(out_ref.dtype)


def _onehot_embed(idx_flat, table_p, token_block):
    n_pad = idx_flat.shape[0]
    v, d_pad = table_p.shape
    itemsize = jnp.dtype(table_p.dtype).itemsize
    idx_2d = idx_flat.reshape(n_pad, 1)

    vmem_need = (v * d_pad + 2 * token_block * d_pad) * itemsize \
        + 2 * token_block * v * 4
    vmem_limit = int(min(max(2 * vmem_need, 16 << 20), 32 << 20))

    return pl.pallas_call(
        _onehot_kernel,
        out_shape=jax.ShapeDtypeStruct((n_pad, d_pad), table_p.dtype),
        grid=(n_pad // token_block,),
        in_specs=[
            pl.BlockSpec((token_block, 1), lambda i: (i, 0)),
            pl.BlockSpec((v, d_pad), lambda i: (0, 0)),  # table resident in VMEM
        ],
        out_specs=pl.BlockSpec((token_block, d_pad), lambda i: (i, 0)),
        compiler_params=pltpu.CompilerParams(
            # Stateless per block: safe to shard across TCs where present (v7x).
            dimension_semantics=("parallel",),
            vmem_limit_bytes=vmem_limit,
        ),
        cost_estimate=pl.CostEstimate(
            flops=2 * n_pad * v * d_pad,
            transcendentals=0,
            bytes_accessed=(v * d_pad + n_pad * d_pad) * itemsize + n_pad * 4,
        ),
    )(idx_2d, table_p)


# ---------------------------------------------------------------------------
# Large-table path: HBM table + double-buffered per-row DMA gather.
# ---------------------------------------------------------------------------
def _gather_kernel(idx_ref, table_hbm, out_ref, gbuf, sems):
    # idx_ref:   (n_chunk,) int32  token ids for this chunk (SMEM, prefetched)
    # table_hbm: (V, Dp)           embedding table, left in HBM (pl.ANY)
    # out_ref:   (TB, Dp)          VMEM output block for this grid step
    # gbuf:      (2, TB, Dp) VMEM  double-buffered gather landing zone
    # sems:      (2,) DMA sems     one per slot
    i = pl.program_id(0)
    nsteps = pl.num_programs(0)
    tb = out_ref.shape[0]
    cur = i % 2
    nxt = 1 - cur

    def issue_block(block_base, slot):
        # Fully unrolled (tb is static): consecutive descriptor pushes can
        # co-issue and every SMEM index read stays ahead of the wait below.
        for t in range(tb):
            row = idx_ref[block_base + t]
            pltpu.make_async_copy(
                table_hbm.at[pl.ds(row, 1), :],
                gbuf.at[slot, pl.ds(t, 1), :],
                sems.at[slot],
            ).start()

    # Prime the pipeline: the very first step gathers its own block.
    @pl.when(i == 0)
    def _():
        issue_block(0, 0)

    # One-block lookahead: issue block i+1's row gathers before draining
    # block i, so the next block's HBM reads overlap this block's VMEM
    # copy-out and the pipelined HBM writeback of out_ref.
    @pl.when(i + 1 < nsteps)
    def _():
        issue_block((i + 1) * tb, nxt)

    # Drain block i with a SINGLE wait whose descriptor covers the whole
    # (TB, Dp) slab: the DMA semaphore counts bytes, and TB row copies of
    # (1, Dp) sum to exactly one (TB, Dp) block.
    pltpu.make_async_copy(gbuf.at[cur], gbuf.at[cur], sems.at[cur]).wait()

    out_ref[...] = gbuf[cur]


def _gather_embed(idx_chunk, table_p, token_block):
    n_chunk = idx_chunk.shape[0]
    v, d_pad = table_p.shape
    itemsize = jnp.dtype(table_p.dtype).itemsize
    grid = n_chunk // token_block

    # 2 pipelined output buffers + 2 gather slots.
    vmem_need = 4 * token_block * d_pad * itemsize
    vmem_limit = int(min(max(2 * vmem_need, 16 << 20), 32 << 20))

    return pl.pallas_call(
        _gather_kernel,
        out_shape=jax.ShapeDtypeStruct((n_chunk, d_pad), table_p.dtype),
        grid_spec=pltpu.PrefetchScalarGridSpec(
            num_scalar_prefetch=1,
            grid=(grid,),
            in_specs=[
                pl.BlockSpec(memory_space=pl.ANY),  # table stays in HBM
            ],
            out_specs=pl.BlockSpec((token_block, d_pad), lambda i, idx: (i, 0)),
            scratch_shapes=[
                pltpu.VMEM((2, token_block, d_pad), table_p.dtype),
                pltpu.SemaphoreType.DMA((2,)),
            ],
        ),
        compiler_params=pltpu.CompilerParams(
            # Lookahead carries DMA/semaphore state across steps => the grid
            # axis must stay on one core ("arbitrary"), never TC-sharded.
            dimension_semantics=("arbitrary",),
            vmem_limit_bytes=vmem_limit,
        ),
        cost_estimate=pl.CostEstimate(
            flops=0,
            transcendentals=0,
            bytes_accessed=2 * n_chunk * d_pad * itemsize + n_chunk * 4,
        ),
    )(idx_chunk, table_p)


# ---------------------------------------------------------------------------
# Wrapper (forward pass of SingleEmbedding).
# ---------------------------------------------------------------------------
@functools.partial(jax.jit, static_argnames=("token_block", "use_gather_path"))
def single_embedding(x, table, *, token_block=128, use_gather_path=None):
    """out[..., :] = table[x[...], :]   (x: int ids, table: (V, D))."""
    assert token_block % 8 == 0
    v, d = table.shape
    itemsize = jnp.dtype(table.dtype).itemsize
    lead_shape = x.shape
    n = int(x.size)

    # Lane-dense rows: pad dim_model up to a multiple of 128 (avoids masked
    # partial stores and sub-512B row DMAs); sliced off at the end.
    d_pad = _round_up(d, 128)
    table_p = table if d_pad == d else jnp.pad(table, ((0, 0), (0, d_pad - d)))

    # Flatten + clip (guards against OOB DMA; valid ids are unchanged).
    # TODO(synk): PyTorch's nn.Embedding raises on out-of-range ids; we clip.
    idx_flat = jnp.clip(x.reshape(n).astype(jnp.int32), 0, v - 1)

    # Pad token count up to a multiple of the block (id 0 is a valid row).
    n_pad = _round_up(max(n, 1), token_block)
    if n_pad != n:
        idx_flat = jnp.pad(idx_flat, (0, n_pad - n))

    if use_gather_path is None:
        use_gather_path = not (v <= 2048 and v * d_pad * itemsize <= (8 << 20))

    if not use_gather_path:
        out_flat = _onehot_embed(idx_flat, table_p, token_block)
    else:
        # Bound the scalar-prefetched (SMEM) index array to <= 32K ids per
        # pallas_call; chunk boundaries are multiples of token_block.
        max_chunk = _round_up(32768, token_block)
        parts = []
        for start in range(0, n_pad, max_chunk):
            size = min(max_chunk, n_pad - start)
            parts.append(
                _gather_embed(idx_flat[start:start + size], table_p, token_block))
        out_flat = parts[0] if len(parts) == 1 else jnp.concatenate(parts, axis=0)

    return out_flat[:n, :d].reshape(*lead_shape, d)


if __name__ == "__main__":
    # Synthetic "vocab.get_vocab_size()" and dim_model (small demo shapes).
    vocab_size = 32
    dim_model = 32
    batch, seq = 2, 8

    key = jax.random.PRNGKey(0)
    k_table, k_idx = jax.random.split(key)

    # Deterministic parameter init (matches nn.Embedding weight shape (V, D)).
    embedding_table = jax.random.normal(
        k_table, (vocab_size, dim_model), dtype=jnp.float32)
    x = jax.random.randint(k_idx, (batch, seq), 0, vocab_size, dtype=jnp.int32)

    ref = jnp.take(embedding_table, x, axis=0)

    # 1) Default dispatch -> small-table fast path (VMEM-resident table, MXU).
    out_fast = jax.block_until_ready(single_embedding(x, embedding_table))
    assert out_fast.shape == (batch, seq, dim_model)
    assert jnp.allclose(out_fast, ref, atol=1e-5), "fast path mismatch"

    # 2) Force the large-table DMA-gather path (single grid step).
    out_gather = jax.block_until_ready(
        single_embedding(x, embedding_table, use_gather_path=True))
    assert out_gather.shape == (batch, seq, dim_model)
    assert jnp.allclose(out_gather, ref, atol=1e-6), "gather path mismatch"

    # 3) Force the gather path with a tiny block so the grid has 2 steps and
    #    the lookahead / slot-parity logic is actually exercised at runtime.
    out_gather2 = jax.block_until_ready(
        single_embedding(x, embedding_table, use_gather_path=True, token_block=8))
    assert out_gather2.shape == (batch, seq, dim_model)
    assert jnp.allclose(out_gather2, ref, atol=1e-6), "gather lookahead mismatch"

    print("KERNEL_OK")
</pallas_src>

<mosaic_0001>
module attributes {stable_mosaic.version = 11 : i64} {
  func.func @_onehot_kernel(%arg0: i32, %arg1: memref<128x1xi32, #tpu.memory_space<vmem>>, %arg2: memref<32x128xf32, #tpu.memory_space<vmem>>, %arg3: memref<128x128xf32, #tpu.memory_space<vmem>>) attributes {dimension_semantics = [#tpu.dimension_semantics<parallel>], iteration_bounds = array<i64: 1>, scalar_prefetch = 0 : i64, scratch_operands = 0 : i64, tpu.core_type = #tpu.core_type<tc>, window_params = [{transform_indices = @transform_0, window_bounds = array<i64: 128, 1>}, {pipeline_mode = #tpu.pipeline_mode<synchronous>, transform_indices = @transform_1, window_bounds = array<i64: 32, 128>}, {transform_indices = @transform_2, window_bounds = array<i64: 128, 128>}]} {
    %0 = tpu.iota {dimensions = array<i32: 1>} : vector<128x32xi32>
    %c0 = arith.constant 0 : index
    %c0_0 = arith.constant 0 : index
    %1 = vector.load %arg1[%c0, %c0_0] : memref<128x1xi32, #tpu.memory_space<vmem>>, vector<128x1xi32>
    %2 = vector.broadcast %1 : vector<128x1xi32> to vector<128x32xi32>
    %3 = arith.cmpi eq, %2, %0 : vector<128x32xi32>
    %4 = arith.extui %3 : vector<128x32xi1> to vector<128x32xi32>
    %5 = arith.sitofp %4 : vector<128x32xi32> to vector<128x32xf32>
    %c0_1 = arith.constant 0 : index
    %c0_2 = arith.constant 0 : index
    %6 = vector.load %arg2[%c0_1, %c0_2] : memref<32x128xf32, #tpu.memory_space<vmem>>, vector<32x128xf32>
    %cst = arith.constant dense<0.000000e+00> : vector<128x128xf32>
    %7 = tpu.matmul %5, %6, %cst {dimension_numbers = #tpu.dot_dimension_numbers<[1], [0], [0], [1], [0, 0, 1, 1], [], []>} : vector<128x32xf32>, vector<32x128xf32>, vector<128x128xf32> -> vector<128x128xf32>
    %c0_3 = arith.constant 0 : index
    %c0_4 = arith.constant 0 : index
    %8 = vector.load %arg3[%c0_3, %c0_4] : memref<128x128xf32, #tpu.memory_space<vmem>>, vector<128x128xf32>
    tpu.vector_store %arg3[%c0_3, %c0_4], %7 {strides = array<i32>} : memref<128x128xf32, #tpu.memory_space<vmem>>, vector<128x128xf32>,
    return
  }
  func.func @transform_0(%arg0: i32) -> (i32, i32) {
    %c0_i32 = arith.constant 0 : i32
    %c0_i32_0 = arith.constant 0 : i32
    return %arg0, %c0_i32 : i32, i32
  }
  func.func @transform_1(%arg0: i32) -> (i32, i32) {
    %c0_i32 = arith.constant 0 : i32
    %c0_i32_0 = arith.constant 0 : i32
    %c0_i32_1 = arith.constant 0 : i32
    return %c0_i32, %c0_i32_0 : i32, i32
  }
  func.func @transform_2(%arg0: i32) -> (i32, i32) {
    %c0_i32 = arith.constant 0 : i32
    %c0_i32_0 = arith.constant 0 : i32
    return %arg0, %c0_i32 : i32, i32
  }
}

</mosaic_0001>

<llo_original>
// kernel: single_embedding.1
$region0: #{single_embedding.1}
  #allocation0 [shape = 'u32[]', space=smem, size = 0x4, offset = 0x4, fixed_abs, tag = 'smem constant byte address 0x4 - core index']
  #allocation1 [shape = 'u32[144,128]{1,0:T(1,128)}', space=vmem, size = 0x12000, scoped, tag = 'internal scratch']
  %s0 = inlined_call_operand.vmem [shape: s32[128,1], index: 0, kind: input, shape index: {}]
  %s1 = inlined_call_operand.vmem [shape: f32[32,128], index: 1, kind: input, shape index: {}]
  %s2 = inlined_call_operand.vmem [shape: f32[128,128], index: 2, kind: output, shape index: {}]
  %s3 = sld [smem:[#allocation0]]
  $region18: #{single_embedding.1} parent=0
    _
  %s5 = ssub.s32 1, %s3
  %s6 = scalar_select 0, %s5, %s3
  // Predicated region
  $region2: #{single_embedding.1} parent=0 // pred_check
    _
  $region3: #{single_embedding.1} parent=0 // pred_check_branch
    %8 = sbr.rel (0) target = $region5
  $region4: #{single_embedding.1} parent=0 // pred_region
    _
  $region5: #{single_embedding.1} parent=0 // pred_fallthru
    _
  // Predicated region
  $region6: #{single_embedding.1} parent=0 // pred_check
    _
  $region7: #{single_embedding.1} parent=0 // pred_check_branch
    %10 = sbr.rel (0) target = $region9
  $region8: #{single_embedding.1} parent=0 // pred_region
    _
  $region9: #{single_embedding.1} parent=0 // pred_fallthru
    _
  %v11 = vlaneseq
  %v12 = vand.u32 %v11, 127
  %v13 = vld [vmem:[%s0] sm:$0xff]
  %v14 = vld [vmem:[%s0 + $0x8] sm:$0xff]
  %v15 = vld [vmem:[%s0 + $0x10] sm:$0xff]
  %v16 = vld [vmem:[%s0 + $0x18] sm:$0xff]
  %v17 = vld [vmem:[%s0 + $0x20] sm:$0xff]
  %v18 = vld [vmem:[%s0 + $0x28] sm:$0xff]
  %v19 = vld [vmem:[%s0 + $0x30] sm:$0xff]
  %v20 = vld [vmem:[%s0 + $0x38] sm:$0xff]
  %v21 = vld [vmem:[%s0 + $0x40] sm:$0xff]
  %v22 = vld [vmem:[%s0 + $0x48] sm:$0xff]
  %v23 = vld [vmem:[%s0 + $0x50] sm:$0xff]
  %v24 = vld [vmem:[%s0 + $0x58] sm:$0xff]
  %v25 = vld [vmem:[%s0 + $0x60] sm:$0xff]
  %v26 = vld [vmem:[%s0 + $0x68] sm:$0xff]
  %v27 = vld [vmem:[%s0 + $0x70] sm:$0xff]
  %v28 = vld [vmem:[%s0 + $0x78] sm:$0xff]
  %29 = vset.pattern.permute.xlu0 0
  %30 = vperm.xlu0 %29, %v13
  %v31 = vpop.permute.xlu0 %30
  %32 = vset.pattern.permute.xlu0 0
  %33 = vperm.xlu0 %32, %v14
  %v34 = vpop.permute.xlu0 %33
  %35 = vset.pattern.permute.xlu0 0
  %36 = vperm.xlu0 %35, %v15
  %v37 = vpop.permute.xlu0 %36
  %38 = vset.pattern.permute.xlu0 0
  %39 = vperm.xlu0 %38, %v16
  %v40 = vpop.permute.xlu0 %39
  %41 = vset.pattern.permute.xlu0 0
  %42 = vperm.xlu0 %41, %v17
  %v43 = vpop.permute.xlu0 %42
  %44 = vset.pattern.permute.xlu0 0
  %45 = vperm.xlu0 %44, %v18
  %v46 = vpop.permute.xlu0 %45
  %47 = vset.pattern.permute.xlu0 0
  %48 = vperm.xlu0 %47, %v19
  %v49 = vpop.permute.xlu0 %48
  %50 = vset.pattern.permute.xlu0 0
  %51 = vperm.xlu0 %50, %v20
  %v52 = vpop.permute.xlu0 %51
  %53 = vset.pattern.permute.xlu0 0
  %54 = vperm.xlu0 %53, %v21
  %v55 = vpop.permute.xlu0 %54
  %56 = vset.pattern.permute.xlu0 0
  %57 = vperm.xlu0 %56, %v22
  %v58 = vpop.permute.xlu0 %57
  %59 = vset.pattern.permute.xlu0 0
  %60 = vperm.xlu0 %59, %v23
  %v61 = vpop.permute.xlu0 %60
  %62 = vset.pattern.permute.xlu0 0
  %63 = vperm.xlu0 %62, %v24
  %v64 = vpop.permute.xlu0 %63
  %65 = vset.pattern.permute.xlu0 0
  %66 = vperm.xlu0 %65, %v25
  %v67 = vpop.permute.xlu0 %66
  %68 = vset.pattern.permute.xlu0 0
  %69 = vperm.xlu0 %68, %v26
  %v70 = vpop.permute.xlu0 %69
  %71 = vset.pattern.permute.xlu0 0
  %72 = vperm.xlu0 %71, %v27
  %v73 = vpop.permute.xlu0 %72
  %74 = vset.pattern.permute.xlu0 0
  %75 = vperm.xlu0 %74, %v28
  %v76 = vpop.permute.xlu0 %75
  %vm77 = vcmp.eq.s32.totalorder %v31, %v12
  %vm78 = vcmp.eq.s32.totalorder %v34, %v12
  %vm79 = vcmp.eq.s32.totalorder %v37, %v12
  %vm80 = vcmp.eq.s32.totalorder %v40, %v12
  %vm81 = vcmp.eq.s32.totalorder %v43, %v12
  %vm82 = vcmp.eq.s32.totalorder %v46, %v12
  %vm83 = vcmp.eq.s32.totalorder %v49, %v12
  %vm84 = vcmp.eq.s32.totalorder %v52, %v12
  %vm85 = vcmp.eq.s32.totalorder %v55, %v12
  %vm86 = vcmp.eq.s32.totalorder %v58, %v12
  %vm87 = vcmp.eq.s32.totalorder %v61, %v12
  %vm88 = vcmp.eq.s32.totalorder %v64, %v12
  %vm89 = vcmp.eq.s32.totalorder %v67, %v12
  %vm90 = vcmp.eq.s32.totalorder %v70, %v12
  %vm91 = vcmp.eq.s32.totalorder %v73, %v12
  %vm92 = vcmp.eq.s32.totalorder %v76, %v12
  %v93 = vsel %vm77, 1, 0
  %v94 = vsel %vm78, 1, 0
  %v95 = vsel %vm79, 1, 0
  %v96 = vsel %vm80, 1, 0
  %v97 = vsel %vm81, 1, 0
  %v98 = vsel %vm82, 1, 0
  %v99 = vsel %vm83, 1, 0
  %v100 = vsel %vm84, 1, 0
  %v101 = vsel %vm85, 1, 0
  %v102 = vsel %vm86, 1, 0
  %v103 = vsel %vm87, 1, 0
  %v104 = vsel %vm88, 1, 0
  %v105 = vsel %vm89, 1, 0
  %v106 = vsel %vm90, 1, 0
  %v107 = vsel %vm91, 1, 0
  %v108 = vsel %vm92, 1, 0
  %v109 = vcvt.s32.f32 %v93
  %v110 = vcvt.s32.f32 %v94
  %v111 = vcvt.s32.f32 %v95
  %v112 = vcvt.s32.f32 %v96
  %v113 = vcvt.s32.f32 %v97
  %v114 = vcvt.s32.f32 %v98
  %v115 = vcvt.s32.f32 %v99
  %v116 = vcvt.s32.f32 %v100
  %v117 = vcvt.s32.f32 %v101
  %v118 = vcvt.s32.f32 %v102
  %v119 = vcvt.s32.f32 %v103
  %v120 = vcvt.s32.f32 %v104
  %v121 = vcvt.s32.f32 %v105
  %v122 = vcvt.s32.f32 %v106
  %v123 = vcvt.s32.f32 %v107
  %v124 = vcvt.s32.f32 %v108
  %v125 = vld [vmem:[%s1] sm:$0xff]
  %v126 = vld [vmem:[%s1 + $0x8] sm:$0xff]
  %v127 = vld [vmem:[%s1 + $0x10] sm:$0xff]
  %v128 = vld [vmem:[%s1 + $0x18] sm:$0xff]
  %vm129 = vcmask 261120
  %v131 = vsel %vm129, %v109, 0
  %v134 = vsel %vm129, %v110, 0
  %v137 = vsel %vm129, %v111, 0
  %v140 = vsel %vm129, %v112, 0
  %v143 = vsel %vm129, %v113, 0
  %v146 = vsel %vm129, %v114, 0
  %v149 = vsel %vm129, %v115, 0
  %v152 = vsel %vm129, %v116, 0
  %v155 = vsel %vm129, %v117, 0
  %v158 = vsel %vm129, %v118, 0
  %v161 = vsel %vm129, %v119, 0
  %v164 = vsel %vm129, %v120, 0
  %v167 = vsel %vm129, %v121, 0
  %v170 = vsel %vm129, %v122, 0
  %v173 = vsel %vm129, %v123, 0
  %v176 = vsel %vm129, %v124, 0
  %178 = vmatprep.subr.mxu0 0.0
  %179 = vmatpush1.msra.mxu0 %v125
  %180 = vmatprep.subr.mxu0 0.0
  %181 = vmatpush1.msra.mxu0 %v126
  %182 = vmatprep.subr.mxu0 0.0
  %183 = vmatpush1.msra.mxu0 %v127
  %184 = vmatprep.subr.mxu0 0.0
  %185 = vmatpush1.msra.mxu0 %v128
  %186 = vmatprep.subr.mxu0 0.0
  %187 = vmatpush1.msra.mxu0 0.0
  %188 = vmatprep.subr.mxu0 0.0
  %189 = vmatpush1.msra.mxu0 0.0
  %190 = vmatprep.subr.mxu0 0.0
  %191 = vmatpush1.msra.mxu0 0.0
  %192 = vmatprep.subr.mxu0 0.0
  %193 = vmatpush1.msra.mxu0 0.0
  %194 = vmatprep.subr.mxu0 0.0
  %195 = vmatpush1.msra.mxu0 0.0
  %196 = vmatprep.subr.mxu0 0.0
  %197 = vmatpush1.msra.mxu0 0.0
  %198 = vmatprep.subr.mxu0 0.0
  %199 = vmatpush1.msra.mxu0 0.0
  %200 = vmatprep.subr.mxu0 0.0
  %201 = vmatpush1.msra.mxu0 0.0
  %202 = vmatprep.subr.mxu0 0.0
  %203 = vmatpush1.msra.mxu0 0.0
  %204 = vmatprep.subr.mxu0 0.0
  %205 = vmatpush1.msra.mxu0 0.0
  %206 = vmatprep.subr.mxu0 0.0
  %207 = vmatpush1.msra.mxu0 0.0
  %208 = vmatprep.subr.mxu0 0.0
  %209 = vmatpush1.msra.mxu0 0.0
  %210 = vmatprep.subr.mxu0 0.0
  %211 = vmatpush1.msra.mxu0 0.0
  %212 = vmatprep.subr.mxu0 0.0
  %213 = vmatpush1.msra.mxu0 0.0
  %214 = vmatprep.subr.mxu0 0.0
  %215 = vmatpush1.msra.mxu0 0.0
  %216 = vmatprep.subr.mxu0 0.0
  %217 = vmatpush1.msra.mxu0 0.0
  %218 = vmatprep.subr.mxu0 0.0
  %219 = vmatpush1.msra.mxu0 0.0
  %220 = vmatprep.subr.mxu0 0.0
  %221 = vmatpush1.msra.mxu0 0.0
  %222 = vmatprep.subr.mxu0 0.0
  %223 = vmatpush1.msra.mxu0 0.0
  %224 = vmatprep.subr.mxu0 0.0
  %225 = vmatpush1.msra.mxu0 0.0
  %226 = vmatprep.subr.mxu0 0.0
  %227 = vmatpush1.msra.mxu0 0.0
  %228 = vmatprep.subr.mxu0 0.0
  %229 = vmatpush1.msra.mxu0 0.0
  %230 = vmatprep.subr.mxu0 0.0
  %231 = vmatpush1.msra.mxu0 0.0
  %232 = vmatprep.subr.mxu0 0.0
  %233 = vmatpush1.msra.mxu0 0.0
  %234 = vmatprep.subr.mxu0 0.0
  %235 = vmatpush1.msra.mxu0 0.0
  %236 = vmatprep.subr.mxu0 0.0
  %237 = vmatpush1.msra.mxu0 0.0
  %238 = vmatprep.subr.mxu0 0.0
  %239 = vmatpush1.msra.mxu0 0.0
  %240 = vmatprep.subr.mxu0 0.0
  %241 = vmatpush1.msra.mxu0 0.0
  %242 = vmatprep.mubr.f32.mxu0 0.0
  %243 = vmatmul.mubr.f32.gmra.mrb[0].mxu0 %v131
  %v244 = vpop.f32.mrb[0].mxu0
  %v245 = vadd.f32 0.0, %v244
  %v246 = vpop.f32.mrb[0].mxu0
  %247 = vmatprep.mubr.f32.mxu0 0.0
  %248 = vmatmul.mubr.f32.gmra.mrb[0].mxu0 %v134
  %v249 = vpop.f32.mrb[0].mxu0
  %v250 = vadd.f32 0.0, %v249
  %v251 = vpop.f32.mrb[0].mxu0
  %252 = vmatprep.mubr.f32.mxu0 0.0
  %253 = vmatmul.mubr.f32.gmra.mrb[0].mxu0 %v137
  %v254 = vpop.f32.mrb[0].mxu0
  %v255 = vadd.f32 0.0, %v254
  %v256 = vpop.f32.mrb[0].mxu0
  %257 = vmatprep.mubr.f32.mxu0 0.0
  %258 = vmatmul.mubr.f32.gmra.mrb[0].mxu0 %v140
  %v259 = vpop.f32.mrb[0].mxu0
  %v260 = vadd.f32 0.0, %v259
  %v261 = vpop.f32.mrb[0].mxu0
  %262 = vmatprep.mubr.f32.mxu0 0.0
  %263 = vmatmul.mubr.f32.gmra.mrb[0].mxu0 %v143
  %v264 = vpop.f32.mrb[0].mxu0
  %v265 = vadd.f32 0.0, %v264
  %v266 = vpop.f32.mrb[0].mxu0
  %267 = vmatprep.mubr.f32.mxu0 0.0
  %268 = vmatmul.mubr.f32.gmra.mrb[0].mxu0 %v146
  %v269 = vpop.f32.mrb[0].mxu0
  %v270 = vadd.f32 0.0, %v269
  %v271 = vpop.f32.mrb[0].mxu0
  %272 = vmatprep.mubr.f32.mxu0 0.0
  %273 = vmatmul.mubr.f32.gmra.mrb[0].mxu0 %v149
  %v274 = vpop.f32.mrb[0].mxu0
  %v275 = vadd.f32 0.0, %v274
  %v276 = vpop.f32.mrb[0].mxu0
  %277 = vmatprep.mubr.f32.mxu0 0.0
  %278 = vmatmul.mubr.f32.gmra.mrb[0].mxu0 %v152
  %v279 = vpop.f32.mrb[0].mxu0
  %v280 = vadd.f32 0.0, %v279
  %v281 = vpop.f32.mrb[0].mxu0
  %282 = vmatprep.mubr.f32.mxu0 0.0
  %283 = vmatmul.mubr.f32.gmra.mrb[0].mxu0 %v155
  %v284 = vpop.f32.mrb[0].mxu0
  %v285 = vadd.f32 0.0, %v284
  %v286 = vpop.f32.mrb[0].mxu0
  %287 = vmatprep.mubr.f32.mxu0 0.0
  %288 = vmatmul.mubr.f32.gmra.mrb[0].mxu0 %v158
  %v289 = vpop.f32.mrb[0].mxu0
  %v290 = vadd.f32 0.0, %v289
  %v291 = vpop.f32.mrb[0].mxu0
  %292 = vmatprep.mubr.f32.mxu0 0.0
  %293 = vmatmul.mubr.f32.gmra.mrb[0].mxu0 %v161
  %v294 = vpop.f32.mrb[0].mxu0
  %v295 = vadd.f32 0.0, %v294
  %v296 = vpop.f32.mrb[0].mxu0
  %297 = vmatprep.mubr.f32.mxu0 0.0
  %298 = vmatmul.mubr.f32.gmra.mrb[0].mxu0 %v164
  %v299 = vpop.f32.mrb[0].mxu0
  %v300 = vadd.f32 0.0, %v299
  %v301 = vpop.f32.mrb[0].mxu0
  %302 = vmatprep.mubr.f32.mxu0 0.0
  %303 = vmatmul.mubr.f32.gmra.mrb[0].mxu0 %v167
  %v304 = vpop.f32.mrb[0].mxu0
  %v305 = vadd.f32 0.0, %v304
  %v306 = vpop.f32.mrb[0].mxu0
  %307 = vmatprep.mubr.f32.mxu0 0.0
  %308 = vmatmul.mubr.f32.gmra.mrb[0].mxu0 %v170
  %v309 = vpop.f32.mrb[0].mxu0
  %v310 = vadd.f32 0.0, %v309
  %v311 = vpop.f32.mrb[0].mxu0
  %312 = vmatprep.mubr.f32.mxu0 0.0
  %313 = vmatmul.mubr.f32.gmra.mrb[0].mxu0 %v173
  %v314 = vpop.f32.mrb[0].mxu0
  %v315 = vadd.f32 0.0, %v314
  %v316 = vpop.f32.mrb[0].mxu0
  %317 = vmatprep.mubr.f32.mxu0 0.0
  %318 = vmatmul.mubr.f32.gmra.mrb[0].mxu0 %v176
  %v319 = vpop.f32.mrb[0].mxu0
  %v320 = vadd.f32 0.0, %v319
  %v321 = vpop.f32.mrb[0].mxu0
  %322 = vdwg.mxu0
  %323 = vst [vmem:[%s2] sm:$0xff] %v245
  %324 = vst [vmem:[%s2 + $0x8] sm:$0xff] %v250
  %325 = vst [vmem:[%s2 + $0x10] sm:$0xff] %v255
  %326 = vst [vmem:[%s2 + $0x18] sm:$0xff] %v260
  %327 = vst [vmem:[%s2 + $0x20] sm:$0xff] %v265
  %328 = vst [vmem:[%s2 + $0x28] sm:$0xff] %v270
  %329 = vst [vmem:[%s2 + $0x30] sm:$0xff] %v275
  %330 = vst [vmem:[%s2 + $0x38] sm:$0xff] %v280
  %331 = vst [vmem:[%s2 + $0x40] sm:$0xff] %v285
  %332 = vst [vmem:[%s2 + $0x48] sm:$0xff] %v290
  %333 = vst [vmem:[%s2 + $0x50] sm:$0xff] %v295
  %334 = vst [vmem:[%s2 + $0x58] sm:$0xff] %v300
  %335 = vst [vmem:[%s2 + $0x60] sm:$0xff] %v305
  %336 = vst [vmem:[%s2 + $0x68] sm:$0xff] %v310
  %337 = vst [vmem:[%s2 + $0x70] sm:$0xff] %v315
  %338 = vst [vmem:[%s2 + $0x78] sm:$0xff] %v320
  // Predicated region
  $region10: #{single_embedding.1} parent=0 // pred_check
    _
  $region11: #{single_embedding.1} parent=0 // pred_check_branch
    %340 = sbr.rel (0) target = $region13
  $region12: #{single_embedding.1} parent=0 // pred_region
    _
  $region13: #{single_embedding.1} parent=0 // pred_fallthru
    _
  // Predicated region
  $region14: #{single_embedding.1} parent=0 // pred_check
    _
  $region15: #{single_embedding.1} parent=0 // pred_check_branch
    %342 = sbr.rel (0) target = $region17
  $region16: #{single_embedding.1} parent=0 // pred_region
    _
  $region17: #{single_embedding.1} parent=0 // pred_fallthru
    _

</llo_original>
